<compile_context>
chip_gen: v6e
topology: v6e:2x2x1
jax: 0.10.0
libtpu: 0.0.40
codegen_flags: <defaults>
</compile_context>

<pallas_src>
import functools
import math

import jax
import jax.numpy as jnp
from jax.experimental import pallas as pl
from jax.experimental.pallas import tpu as pltpu


def _power_sum_kernel(n_rows, tile_b, n_moments, tiles_per_split, full_tiles,
                      all_full, shift_ref, x_ref, acc_ref):
    """Accumulates shifted power sums S_j = sum_rows (x - shift)^j, j=1..n_moments.

    Grid is (split, tile); the output block (index depends only on `split`)
    stays resident in VMEM across the inner 'arbitrary' tile axis.
    """
    s = pl.program_id(0)
    i = pl.program_id(1)

    @pl.when(i == 0)
    def _init():
        acc_ref[...] = jnp.zeros_like(acc_ref)

    # Stream in the native dtype, accumulate in f32.
    xc = x_ref[...].astype(jnp.float32) - shift_ref[...]          # (tile_b, D)

    def _accumulate(v):
        p = v
        acc_ref[0:1, :] += jnp.sum(p, axis=0, keepdims=True)       # S_1
        for k in range(2, n_moments + 1):
            p = p * v                                              # (x-c)^k
            acc_ref[k - 1:k, :] += jnp.sum(p, axis=0, keepdims=True)

    if all_full:
        # Every grid tile is completely inside the batch: unmasked fast path.
        _accumulate(xc)
    else:
        tile_idx = s * tiles_per_split + i                         # global tile
        is_full = tile_idx < full_tiles

        @pl.when(is_full)
        def _fast():
            _accumulate(xc)

        @pl.when(jnp.logical_not(is_full))
        def _ragged():
            rows = (jax.lax.broadcasted_iota(jnp.int32, xc.shape, 0)
                    + tile_idx * tile_b)
            _accumulate(jnp.where(rows < n_rows, xc, 0.0))


def _sublane(dtype):
    itemsize = jnp.dtype(dtype).itemsize
    return {4: 8, 2: 16, 1: 32}.get(itemsize, 8)


def _auto_tile(n, d, dtype):
    """Size the batch tile from a VMEM budget (~12 MiB per input block)."""
    itemsize = jnp.dtype(dtype).itemsize
    budget = 12 << 20                               # bytes per (double-buffered) block
    tile = budget // max(1, d * itemsize)
    if tile >= n:
        return n                                    # whole input VMEM-resident
    sub = _sublane(dtype)
    return max(sub, (tile // sub) * sub)


def _moment_stats(x, n_moments, tile_b=None):
    """Returns (mean (D,), central moments k=2..n_moments as (n_moments-1, D) or None)."""
    n, d = x.shape
    itemsize = jnp.dtype(x.dtype).itemsize
    sub = _sublane(x.dtype)

    if tile_b is None:
        tile_b = _auto_tile(n, d, x.dtype)
    else:
        tile_b = n if tile_b >= n else max(sub, (tile_b // sub) * sub)

    num_tiles = -(-n // tile_b)
    n_splits = 2 if num_tiles >= 2 else 1           # use both TCs on v7x
    tiles_per_split = -(-num_tiles // n_splits)
    full_tiles = n // tile_b                        # tiles with no padding rows
    all_full = (n % tile_b == 0) and (num_tiles == n_splits * tiles_per_split)
    mom_pad = ((n_moments + 7) // 8) * 8            # sublane-aligned moment rows

    # Cheap near-mean shift (any constant is mathematically exact; a near-mean
    # shift keeps the f32 shifted power sums well conditioned).
    shift = jnp.mean(x[: min(n, 128)].astype(jnp.float32), axis=0, keepdims=True)

    last_block = num_tiles - 1

    def x_index_map(s, i):
        # Clamp the (possibly padded) global tile index; padded tiles are fully
        # masked inside the kernel so their contribution is zero.
        return (jnp.minimum(s * tiles_per_split + i, last_block), 0)

    block_bytes = tile_b * d * itemsize
    vmem_limit = int(min(max(2 * block_bytes + 4 * mom_pad * d * 4 + (4 << 20),
                             32 << 20),
                         48 << 20))                 # fits v7x's 64 MiB VMEM

    kernel = functools.partial(_power_sum_kernel, n, tile_b, n_moments,
                               tiles_per_split, full_tiles, all_full)

    psums = pl.pallas_call(
        kernel,
        out_shape=jax.ShapeDtypeStruct((n_splits * mom_pad, d), jnp.float32),
        grid_spec=pltpu.PrefetchScalarGridSpec(
            num_scalar_prefetch=0,
            grid=(n_splits, tiles_per_split),
            in_specs=[
                pl.BlockSpec((1, d), lambda s, i: (0, 0)),        # shift
                pl.BlockSpec((tile_b, d), x_index_map),           # batch tiles
            ],
            out_specs=pl.BlockSpec((mom_pad, d), lambda s, i: (s, 0)),
        ),
        compiler_params=pltpu.CompilerParams(
            dimension_semantics=("parallel", "arbitrary"),
            vmem_limit_bytes=vmem_limit),
        cost_estimate=pl.CostEstimate(
            flops=3 * n * d * max(1, n_moments),
            transcendentals=0,
            bytes_accessed=n * d * itemsize + n_splits * mom_pad * d * 4),
    )(shift, x)

    # Combine per-split partials and convert shifted power sums -> central
    # moments (exact binomial expansion); tiny, stays in plain JAX.
    S = jnp.sum(psums.reshape(n_splits, mom_pad, d)[:, :n_moments, :], axis=0)
    inv_n = 1.0 / float(n)
    delta = S[0] * inv_n                            # mean - shift
    mean = shift[0] + delta
    if n_moments < 2:
        return mean, None

    central = []
    for k in range(2, n_moments + 1):
        m_k = (-delta) ** k                         # j = 0 term (S_0/n = 1)
        for j in range(1, k + 1):
            m_k = m_k + math.comb(k, j) * (S[j - 1] * inv_n) * ((-delta) ** (k - j))
        central.append(m_k)
    return mean, jnp.stack(central, axis=0)         # (n_moments-1, D)


def cmd_forward(x1, x2, n_moments, tile_b=None):
    """CMD(x1, x2, n_moments): x1 (N1, D), x2 (N2, D); returns a scalar."""
    assert x1.ndim == 2 and x2.ndim == 2 and x1.shape[1] == x2.shape[1]
    assert isinstance(n_moments, int) and n_moments >= 1

    m1, c1 = _moment_stats(x1, n_moments, tile_b)
    m2, c2 = _moment_stats(x2, n_moments, tile_b)

    scms = jnp.sqrt(jnp.sum((m1 - m2) ** 2))
    if n_moments >= 2:
        ds = c1 - c2                                              # (n_moments-1, D)
        scms = scms + jnp.sum(jnp.sqrt(jnp.sum(ds * ds, axis=1)))
    return scms


def reference_cmd(x1, x2, n_moments):
    """Plain-JAX reference mirroring the PyTorch module."""
    mx1 = jnp.mean(x1, 0)
    mx2 = jnp.mean(x2, 0)
    sx1 = x1 - mx1
    sx2 = x2 - mx2

    def matchnorm(a, b):
        return jnp.sqrt(jnp.sum((a - b) ** 2))

    scms = matchnorm(mx1, mx2)
    for i in range(n_moments - 1):
        k = i + 2
        scms = scms + matchnorm(jnp.mean(sx1 ** k, 0), jnp.mean(sx2 ** k, 0))
    return scms


if __name__ == "__main__":
    key = jax.random.PRNGKey(0)
    k1, k2 = jax.random.split(key)

    n_moments = 5
    # Ragged batch sizes to exercise masking / padded-tile handling.
    x1 = jax.random.normal(k1, (100, 256), jnp.float32)
    x2 = jax.random.normal(k2, (72, 256), jnp.float32) * 1.2 + 0.1

    cmd = jax.jit(cmd_forward, static_argnums=(2, 3))
    ref = reference_cmd(x1, x2, n_moments)

    # Auto-sized path: whole input fits in a single VMEM-resident block.
    out = jax.block_until_ready(cmd(x1, x2, n_moments, None))
    assert out.shape == ()
    assert bool(jnp.isfinite(out))
    assert jnp.allclose(out, ref, rtol=1e-3, atol=1e-3), (out, ref)

    # Forced small tiles: exercises multi-tile streaming, the 2-way split
    # (both TensorCores on v7x) and the ragged/padded-tile masked path.
    out_tiled = jax.block_until_ready(cmd(x1, x2, n_moments, 32))
    assert jnp.allclose(out_tiled, ref, rtol=1e-3, atol=1e-3), (out_tiled, ref)

    print("KERNEL_OK")
</pallas_src>

<mosaic_0001>
module attributes {stable_mosaic.version = 11 : i64} {
  func.func @_power_sum_kernel(%arg0: i32, %arg1: i32, %arg2: memref<1x256xf32, #tpu.memory_space<vmem>>, %arg3: memref<72x256xf32, #tpu.memory_space<vmem>>, %arg4: memref<8x256xf32, #tpu.memory_space<vmem>>) attributes {dimension_semantics = [#tpu.dimension_semantics<parallel>, #tpu.dimension_semantics<arbitrary>], iteration_bounds = array<i64: 1, 1>, scalar_prefetch = 0 : i64, scratch_operands = 0 : i64, tpu.core_type = #tpu.core_type<tc>, window_params = [{pipeline_mode = #tpu.pipeline_mode<synchronous>, transform_indices = @transform_0, window_bounds = array<i64: 1, 256>}, {transform_indices = @transform_1, window_bounds = array<i64: 72, 256>}, {transform_indices = @transform_2, window_bounds = array<i64: 8, 256>}]} {
    %c0_i32 = arith.constant 0 : i32
    %0 = arith.cmpi eq, %arg1, %c0_i32 : i32
    %1 = arith.extui %0 : i1 to i32
    %c0_i32_0 = arith.constant 0 : i32
    %2 = arith.cmpi ne, %1, %c0_i32_0 : i32
    scf.if %2 {
      %cst_24 = arith.constant 0.000000e+00 : f32
      %36 = vector.broadcast %cst_24 : f32 to vector<8x256xf32>
      %c0_25 = arith.constant 0 : index
      %c0_26 = arith.constant 0 : index
      %37 = vector.load %arg4[%c0_25, %c0_26] : memref<8x256xf32, #tpu.memory_space<vmem>>, vector<8x256xf32>
      tpu.vector_store %arg4[%c0_25, %c0_26], %36 {strides = array<i32>} : memref<8x256xf32, #tpu.memory_space<vmem>>, vector<8x256xf32>,
    } else {
    }
    %c0 = arith.constant 0 : index
    %c0_1 = arith.constant 0 : index
    %3 = vector.load %arg3[%c0, %c0_1] : memref<72x256xf32, #tpu.memory_space<vmem>>, vector<72x256xf32>
    %c0_2 = arith.constant 0 : index
    %c0_3 = arith.constant 0 : index
    %4 = vector.load %arg2[%c0_2, %c0_3] : memref<1x256xf32, #tpu.memory_space<vmem>>, vector<1x256xf32>
    %5 = vector.broadcast %4 : vector<1x256xf32> to vector<72x256xf32>
    %6 = arith.subf %3, %5 : vector<72x256xf32>
    %c0_4 = arith.constant 0 : index
    %c0_5 = arith.constant 0 : index
    %7 = vector.load %arg4[%c0_4, %c0_5] : memref<8x256xf32, #tpu.memory_space<vmem>>, vector<1x256xf32>
    %cst = arith.constant dense<0.000000e+00> : vector<256xf32>
    %8 = vector.multi_reduction <add>, %6, %cst [0] : vector<72x256xf32> to vector<256xf32>
    %9 = vector.shape_cast %8 : vector<256xf32> to vector<1x256xf32>
    %10 = arith.addf %7, %9 : vector<1x256xf32>
    %c0_6 = arith.constant 0 : index
    %c0_7 = arith.constant 0 : index
    %11 = vector.load %arg4[%c0_6, %c0_7] : memref<8x256xf32, #tpu.memory_space<vmem>>, vector<1x256xf32>
    tpu.vector_store %arg4[%c0_6, %c0_7], %10 {strides = array<i32>} : memref<8x256xf32, #tpu.memory_space<vmem>>, vector<1x256xf32>,
    %12 = arith.mulf %6, %6 : vector<72x256xf32>
    %c1 = arith.constant 1 : index
    %c0_8 = arith.constant 0 : index
    %13 = vector.load %arg4[%c1, %c0_8] : memref<8x256xf32, #tpu.memory_space<vmem>>, vector<1x256xf32>
    %cst_9 = arith.constant dense<0.000000e+00> : vector<256xf32>
    %14 = vector.multi_reduction <add>, %12, %cst_9 [0] : vector<72x256xf32> to vector<256xf32>
    %15 = vector.shape_cast %14 : vector<256xf32> to vector<1x256xf32>
    %16 = arith.addf %13, %15 : vector<1x256xf32>
    %c1_10 = arith.constant 1 : index
    %c0_11 = arith.constant 0 : index
    %17 = vector.load %arg4[%c1_10, %c0_11] : memref<8x256xf32, #tpu.memory_space<vmem>>, vector<1x256xf32>
    tpu.vector_store %arg4[%c1_10, %c0_11], %16 {strides = array<i32>} : memref<8x256xf32, #tpu.memory_space<vmem>>, vector<1x256xf32>,
    %18 = arith.mulf %12, %6 : vector<72x256xf32>
    %c2 = arith.constant 2 : index
    %c0_12 = arith.constant 0 : index
    %19 = vector.load %arg4[%c2, %c0_12] : memref<8x256xf32, #tpu.memory_space<vmem>>, vector<1x256xf32>
    %cst_13 = arith.constant dense<0.000000e+00> : vector<256xf32>
    %20 = vector.multi_reduction <add>, %18, %cst_13 [0] : vector<72x256xf32> to vector<256xf32>
    %21 = vector.shape_cast %20 : vector<256xf32> to vector<1x256xf32>
    %22 = arith.addf %19, %21 : vector<1x256xf32>
    %c2_14 = arith.constant 2 : index
    %c0_15 = arith.constant 0 : index
    %23 = vector.load %arg4[%c2_14, %c0_15] : memref<8x256xf32, #tpu.memory_space<vmem>>, vector<1x256xf32>
    tpu.vector_store %arg4[%c2_14, %c0_15], %22 {strides = array<i32>} : memref<8x256xf32, #tpu.memory_space<vmem>>, vector<1x256xf32>,
    %24 = arith.mulf %18, %6 : vector<72x256xf32>
    %c3 = arith.constant 3 : index
    %c0_16 = arith.constant 0 : index
    %25 = vector.load %arg4[%c3, %c0_16] : memref<8x256xf32, #tpu.memory_space<vmem>>, vector<1x256xf32>
    %cst_17 = arith.constant dense<0.000000e+00> : vector<256xf32>
    %26 = vector.multi_reduction <add>, %24, %cst_17 [0] : vector<72x256xf32> to vector<256xf32>
    %27 = vector.shape_cast %26 : vector<256xf32> to vector<1x256xf32>
    %28 = arith.addf %25, %27 : vector<1x256xf32>
    %c3_18 = arith.constant 3 : index
    %c0_19 = arith.constant 0 : index
    %29 = vector.load %arg4[%c3_18, %c0_19] : memref<8x256xf32, #tpu.memory_space<vmem>>, vector<1x256xf32>
    tpu.vector_store %arg4[%c3_18, %c0_19], %28 {strides = array<i32>} : memref<8x256xf32, #tpu.memory_space<vmem>>, vector<1x256xf32>,
    %30 = arith.mulf %24, %6 : vector<72x256xf32>
    %c4 = arith.constant 4 : index
    %c0_20 = arith.constant 0 : index
    %31 = vector.load %arg4[%c4, %c0_20] : memref<8x256xf32, #tpu.memory_space<vmem>>, vector<1x256xf32>
    %cst_21 = arith.constant dense<0.000000e+00> : vector<256xf32>
    %32 = vector.multi_reduction <add>, %30, %cst_21 [0] : vector<72x256xf32> to vector<256xf32>
    %33 = vector.shape_cast %32 : vector<256xf32> to vector<1x256xf32>
    %34 = arith.addf %31, %33 : vector<1x256xf32>
    %c4_22 = arith.constant 4 : index
    %c0_23 = arith.constant 0 : index
    %35 = vector.load %arg4[%c4_22, %c0_23] : memref<8x256xf32, #tpu.memory_space<vmem>>, vector<1x256xf32>
    tpu.vector_store %arg4[%c4_22, %c0_23], %34 {strides = array<i32>} : memref<8x256xf32, #tpu.memory_space<vmem>>, vector<1x256xf32>,
    return
  }
  func.func @transform_0(%arg0: i32, %arg1: i32) -> (i32, i32) {
    %c0_i32 = arith.constant 0 : i32
    %c0_i32_0 = arith.constant 0 : i32
    %c0_i32_1 = arith.constant 0 : i32
    return %c0_i32, %c0_i32_0 : i32, i32
  }
  func.func @transform_1(%arg0: i32, %arg1: i32) -> (i32, i32) {
    %c1_i32 = arith.constant 1 : i32
    %0 = arith.muli %arg0, %c1_i32 : i32
    %1 = arith.addi %0, %arg1 : i32
    %c0_i32 = arith.constant 0 : i32
    %2 = arith.minsi %1, %c0_i32 : i32
    %c0_i32_0 = arith.constant 0 : i32
    %c0_i32_1 = arith.constant 0 : i32
    return %2, %c0_i32_0 : i32, i32
  }
  func.func @transform_2(%arg0: i32, %arg1: i32) -> (i32, i32) {
    %c0_i32 = arith.constant 0 : i32
    %c0_i32_0 = arith.constant 0 : i32
    return %arg0, %c0_i32 : i32, i32
  }
}

module attributes {stable_mosaic.version = 11 : i64} {
  func.func @_power_sum_kernel(%arg0: i32, %arg1: i32, %arg2: memref<1x256xf32, #tpu.memory_space<vmem>>, %arg3: memref<100x256xf32, #tpu.memory_space<vmem>>, %arg4: memref<8x256xf32, #tpu.memory_space<vmem>>) attributes {dimension_semantics = [#tpu.dimension_semantics<parallel>, #tpu.dimension_semantics<arbitrary>], iteration_bounds = array<i64: 1, 1>, scalar_prefetch = 0 : i64, scratch_operands = 0 : i64, tpu.core_type = #tpu.core_type<tc>, window_params = [{pipeline_mode = #tpu.pipeline_mode<synchronous>, transform_indices = @transform_0, window_bounds = array<i64: 1, 256>}, {transform_indices = @transform_1, window_bounds = array<i64: 100, 256>}, {transform_indices = @transform_2, window_bounds = array<i64: 8, 256>}]} {
    %c0_i32 = arith.constant 0 : i32
    %0 = arith.cmpi eq, %arg1, %c0_i32 : i32
    %1 = arith.extui %0 : i1 to i32
    %c0_i32_0 = arith.constant 0 : i32
    %2 = arith.cmpi ne, %1, %c0_i32_0 : i32
    scf.if %2 {
      %cst_24 = arith.constant 0.000000e+00 : f32
      %36 = vector.broadcast %cst_24 : f32 to vector<8x256xf32>
      %c0_25 = arith.constant 0 : index
      %c0_26 = arith.constant 0 : index
      %37 = vector.load %arg4[%c0_25, %c0_26] : memref<8x256xf32, #tpu.memory_space<vmem>>, vector<8x256xf32>
      tpu.vector_store %arg4[%c0_25, %c0_26], %36 {strides = array<i32>} : memref<8x256xf32, #tpu.memory_space<vmem>>, vector<8x256xf32>,
    } else {
    }
    %c0 = arith.constant 0 : index
    %c0_1 = arith.constant 0 : index
    %3 = vector.load %arg3[%c0, %c0_1] : memref<100x256xf32, #tpu.memory_space<vmem>>, vector<100x256xf32>
    %c0_2 = arith.constant 0 : index
    %c0_3 = arith.constant 0 : index
    %4 = vector.load %arg2[%c0_2, %c0_3] : memref<1x256xf32, #tpu.memory_space<vmem>>, vector<1x256xf32>
    %5 = vector.broadcast %4 : vector<1x256xf32> to vector<100x256xf32>
    %6 = arith.subf %3, %5 : vector<100x256xf32>
    %c0_4 = arith.constant 0 : index
    %c0_5 = arith.constant 0 : index
    %7 = vector.load %arg4[%c0_4, %c0_5] : memref<8x256xf32, #tpu.memory_space<vmem>>, vector<1x256xf32>
    %cst = arith.constant dense<0.000000e+00> : vector<256xf32>
    %8 = vector.multi_reduction <add>, %6, %cst [0] : vector<100x256xf32> to vector<256xf32>
    %9 = vector.shape_cast %8 : vector<256xf32> to vector<1x256xf32>
    %10 = arith.addf %7, %9 : vector<1x256xf32>
    %c0_6 = arith.constant 0 : index
    %c0_7 = arith.constant 0 : index
    %11 = vector.load %arg4[%c0_6, %c0_7] : memref<8x256xf32, #tpu.memory_space<vmem>>, vector<1x256xf32>
    tpu.vector_store %arg4[%c0_6, %c0_7], %10 {strides = array<i32>} : memref<8x256xf32, #tpu.memory_space<vmem>>, vector<1x256xf32>,
    %12 = arith.mulf %6, %6 : vector<100x256xf32>
    %c1 = arith.constant 1 : index
    %c0_8 = arith.constant 0 : index
    %13 = vector.load %arg4[%c1, %c0_8] : memref<8x256xf32, #tpu.memory_space<vmem>>, vector<1x256xf32>
    %cst_9 = arith.constant dense<0.000000e+00> : vector<256xf32>
    %14 = vector.multi_reduction <add>, %12, %cst_9 [0] : vector<100x256xf32> to vector<256xf32>
    %15 = vector.shape_cast %14 : vector<256xf32> to vector<1x256xf32>
    %16 = arith.addf %13, %15 : vector<1x256xf32>
    %c1_10 = arith.constant 1 : index
    %c0_11 = arith.constant 0 : index
    %17 = vector.load %arg4[%c1_10, %c0_11] : memref<8x256xf32, #tpu.memory_space<vmem>>, vector<1x256xf32>
    tpu.vector_store %arg4[%c1_10, %c0_11], %16 {strides = array<i32>} : memref<8x256xf32, #tpu.memory_space<vmem>>, vector<1x256xf32>,
    %18 = arith.mulf %12, %6 : vector<100x256xf32>
    %c2 = arith.constant 2 : index
    %c0_12 = arith.constant 0 : index
    %19 = vector.load %arg4[%c2, %c0_12] : memref<8x256xf32, #tpu.memory_space<vmem>>, vector<1x256xf32>
    %cst_13 = arith.constant dense<0.000000e+00> : vector<256xf32>
    %20 = vector.multi_reduction <add>, %18, %cst_13 [0] : vector<100x256xf32> to vector<256xf32>
    %21 = vector.shape_cast %20 : vector<256xf32> to vector<1x256xf32>
    %22 = arith.addf %19, %21 : vector<1x256xf32>
    %c2_14 = arith.constant 2 : index
    %c0_15 = arith.constant 0 : index
    %23 = vector.load %arg4[%c2_14, %c0_15] : memref<8x256xf32, #tpu.memory_space<vmem>>, vector<1x256xf32>
    tpu.vector_store %arg4[%c2_14, %c0_15], %22 {strides = array<i32>} : memref<8x256xf32, #tpu.memory_space<vmem>>, vector<1x256xf32>,
    %24 = arith.mulf %18, %6 : vector<100x256xf32>
    %c3 = arith.constant 3 : index
    %c0_16 = arith.constant 0 : index
    %25 = vector.load %arg4[%c3, %c0_16] : memref<8x256xf32, #tpu.memory_space<vmem>>, vector<1x256xf32>
    %cst_17 = arith.constant dense<0.000000e+00> : vector<256xf32>
    %26 = vector.multi_reduction <add>, %24, %cst_17 [0] : vector<100x256xf32> to vector<256xf32>
    %27 = vector.shape_cast %26 : vector<256xf32> to vector<1x256xf32>
    %28 = arith.addf %25, %27 : vector<1x256xf32>
    %c3_18 = arith.constant 3 : index
    %c0_19 = arith.constant 0 : index
    %29 = vector.load %arg4[%c3_18, %c0_19] : memref<8x256xf32, #tpu.memory_space<vmem>>, vector<1x256xf32>
    tpu.vector_store %arg4[%c3_18, %c0_19], %28 {strides = array<i32>} : memref<8x256xf32, #tpu.memory_space<vmem>>, vector<1x256xf32>,
    %30 = arith.mulf %24, %6 : vector<100x256xf32>
    %c4 = arith.constant 4 : index
    %c0_20 = arith.constant 0 : index
    %31 = vector.load %arg4[%c4, %c0_20] : memref<8x256xf32, #tpu.memory_space<vmem>>, vector<1x256xf32>
    %cst_21 = arith.constant dense<0.000000e+00> : vector<256xf32>
    %32 = vector.multi_reduction <add>, %30, %cst_21 [0] : vector<100x256xf32> to vector<256xf32>
    %33 = vector.shape_cast %32 : vector<256xf32> to vector<1x256xf32>
    %34 = arith.addf %31, %33 : vector<1x256xf32>
    %c4_22 = arith.constant 4 : index
    %c0_23 = arith.constant 0 : index
    %35 = vector.load %arg4[%c4_22, %c0_23] : memref<8x256xf32, #tpu.memory_space<vmem>>, vector<1x256xf32>
    tpu.vector_store %arg4[%c4_22, %c0_23], %34 {strides = array<i32>} : memref<8x256xf32, #tpu.memory_space<vmem>>, vector<1x256xf32>,
    return
  }
  func.func @transform_0(%arg0: i32, %arg1: i32) -> (i32, i32) {
    %c0_i32 = arith.constant 0 : i32
    %c0_i32_0 = arith.constant 0 : i32
    %c0_i32_1 = arith.constant 0 : i32
    return %c0_i32, %c0_i32_0 : i32, i32
  }
  func.func @transform_1(%arg0: i32, %arg1: i32) -> (i32, i32) {
    %c1_i32 = arith.constant 1 : i32
    %0 = arith.muli %arg0, %c1_i32 : i32
    %1 = arith.addi %0, %arg1 : i32
    %c0_i32 = arith.constant 0 : i32
    %2 = arith.minsi %1, %c0_i32 : i32
    %c0_i32_0 = arith.constant 0 : i32
    %c0_i32_1 = arith.constant 0 : i32
    return %2, %c0_i32_0 : i32, i32
  }
  func.func @transform_2(%arg0: i32, %arg1: i32) -> (i32, i32) {
    %c0_i32 = arith.constant 0 : i32
    %c0_i32_0 = arith.constant 0 : i32
    return %arg0, %c0_i32 : i32, i32
  }
}

</mosaic_0001>

<llo_original>
// kernel: cmd_forward.3
$region0: #{cmd_forward.3}
  #allocation0 [shape = 'u32[]', space=smem, size = 0x4, offset = 0x4, fixed_abs, tag = 'smem constant byte address 0x4 - core index']
  #allocation1 [shape = 'u32[144,128]{1,0:T(1,128)}', space=vmem, size = 0x12000, scoped, tag = 'internal scratch']
  %s0 = inlined_call_operand.vmem [shape: f32[1,256], index: 0, kind: input, shape index: {}]
  %s1 = inlined_call_operand.vmem [shape: f32[72,256], index: 1, kind: input, shape index: {}]
  %s2 = inlined_call_operand.vmem [shape: f32[8,256], index: 2, kind: output, shape index: {}]
  %s3 = sld [smem:[#allocation0]]
  $region22: #{cmd_forward.3} parent=0
    _
  %s5 = ssub.s32 1, %s3
  %s6 = scalar_select 0, %s5, %s3
  // Predicated region
  $region2: #{cmd_forward.3} parent=0 // pred_check
    _
  $region3: #{cmd_forward.3} parent=0 // pred_check_branch
    %8 = sbr.rel (0) target = $region5
  $region4: #{cmd_forward.3} parent=0 // pred_region
    _
  $region5: #{cmd_forward.3} parent=0 // pred_fallthru
    _
  // Predicated region
  $region6: #{cmd_forward.3} parent=0 // pred_check
    _
  $region7: #{cmd_forward.3} parent=0 // pred_check_branch
    %10 = sbr.rel (0) target = $region9
  $region8: #{cmd_forward.3} parent=0 // pred_region
    %s11 = sadd.s32 0, 0
    %p12 = scmp.lt.s32.totalorder %s11, 0
    %s13 = scalar_select %p12, %s11, 0
    %s14 = smul.u32 9, %s13
    %p15 = scmp.lt.s32.totalorder %s14, 8
    %s16 = scalar_select %p15, %s14, 8
    %s17 = smul.addr %s16, 2
    %s18 = smul.addr %s17, 8
    %s19 = scalar_lea.vmem %s1, %s18
    %s20 = sadd.s32 0, 0
    %p21 = scmp.lt.s32.totalorder %s20, 0
    %s22 = scalar_select %p21, %s20, 0
    %s23 = smul.u32 9, %s22
  $region9: #{cmd_forward.3} parent=0 // pred_fallthru
    _
  %s24 = sadd.s32 0, 0
  %p25 = scmp.lt.s32.totalorder %s24, 0
  %s26 = scalar_select %p25, %s24, 0
  %s27 = smul.u32 9, %s26
  %p28 = scmp.lt.s32.totalorder %s27, 8
  %s29 = scalar_select %p28, %s27, 8
  %s30 = smul.addr %s29, 2
  %s31 = smul.addr %s30, 8
  %s32 = scalar_lea.vmem %s1, %s31
  %s33 = sadd.s32 0, 0
  %p34 = scmp.lt.s32.totalorder %s33, 0
  %s35 = scalar_select %p34, %s33, 0
  %s36 = smul.u32 9, %s35
  %p37 = scmp.lt.s32.totalorder %s36, 8
  %s38 = scalar_select %p37, %s36, 8
  %s39 = smul.addr %s38, 2
  %s40 = smul.addr %s39, 8
  %s41 = scalar_lea.vmem %s1, %s40
  %s42 = sadd.s32 0, 0
  %p43 = scmp.lt.s32.totalorder %s42, 0
  %s44 = scalar_select %p43, %s42, 0
  %s45 = smul.u32 9, %s44
  %p46 = scmp.eq.s32.totalorder 0, 0
  // Predicated region
  $region10: #{cmd_forward.3} parent=0 // pred_check
    %p47 = pneg %p46
  $region11: #{cmd_forward.3} parent=0 // pred_check_branch
    %49 = sbr.rel (%p47) target = $region13
  $region12: #{cmd_forward.3} parent=0 // pred_region
    %50 = vst [vmem:[%s2] sm:$0xff] 0.0
    %51 = vst [vmem:[%s2 + $0x8] sm:$0xff] 0.0
  $region13: #{cmd_forward.3} parent=0 // pred_fallthru
    _
  %v52 = vld [vmem:[%s41] sm:$0xff]
  %v53 = vld [vmem:[%s41 + $0x8] sm:$0xff]
  %v54 = vld [vmem:[%s41 + $0x10] sm:$0xff]
  %v55 = vld [vmem:[%s41 + $0x18] sm:$0xff]
  %v56 = vld [vmem:[%s41 + $0x20] sm:$0xff]
  %v57 = vld [vmem:[%s41 + $0x28] sm:$0xff]
  %v58 = vld [vmem:[%s41 + $0x30] sm:$0xff]
  %v59 = vld [vmem:[%s41 + $0x38] sm:$0xff]
  %v60 = vld [vmem:[%s41 + $0x40] sm:$0xff]
  %v61 = vld [vmem:[%s41 + $0x48] sm:$0xff]
  %v62 = vld [vmem:[%s41 + $0x50] sm:$0xff]
  %v63 = vld [vmem:[%s41 + $0x58] sm:$0xff]
  %v64 = vld [vmem:[%s41 + $0x60] sm:$0xff]
  %v65 = vld [vmem:[%s41 + $0x68] sm:$0xff]
  %v66 = vld [vmem:[%s41 + $0x70] sm:$0xff]
  %v67 = vld [vmem:[%s41 + $0x78] sm:$0xff]
  %v68 = vld [vmem:[%s41 + $0x80] sm:$0xff]
  %v69 = vld [vmem:[%s41 + $0x88] sm:$0xff]
  %v70 = vld [vmem:[%s0] sm:$0x3]
  %v72 = vlaneseq
  %v73 = vshrl.u32 %v72, 7
  %v74 = vsub.s32 0, %v73
  %v75 = vrot.slane %v70, %v74
  %v76 = vlaneseq
  %v77 = vshrl.u32 %v76, 7
  %v78 = vsub.s32 1, %v77
  %v79 = vrot.slane %v70, %v78
  %v82 = vsub.f32 %v52, %v75
  %v83 = vsub.f32 %v53, %v79
  %v84 = vsub.f32 %v54, %v75
  %v85 = vsub.f32 %v55, %v79
  %v86 = vsub.f32 %v56, %v75
  %v87 = vsub.f32 %v57, %v79
  %v88 = vsub.f32 %v58, %v75
  %v89 = vsub.f32 %v59, %v79
  %v90 = vsub.f32 %v60, %v75
  %v91 = vsub.f32 %v61, %v79
  %v92 = vsub.f32 %v62, %v75
  %v93 = vsub.f32 %v63, %v79
  %v94 = vsub.f32 %v64, %v75
  %v95 = vsub.f32 %v65, %v79
  %v96 = vsub.f32 %v66, %v75
  %v97 = vsub.f32 %v67, %v79
  %v98 = vsub.f32 %v68, %v75
  %v99 = vsub.f32 %v69, %v79
  %v100 = vld [vmem:[%s2] ss:$8 sm:$0x3]
  %v101 = vadd.f32 %v82, %v84
  %v102 = vadd.f32 %v101, %v86
  %v103 = vadd.f32 %v102, %v88
  %v104 = vadd.f32 %v103, %v90
  %v105 = vadd.f32 %v104, %v92
  %v106 = vadd.f32 %v105, %v94
  %v107 = vadd.f32 %v106, %v96
  %v108 = vadd.f32 %v107, %v98
  %v109 = vrot.slane %v108, 4
  %v110 = vadd.f32 %v108, %v109
  %v111 = vrot.slane %v110, 2
  %v112 = vadd.f32 %v110, %v111
  %v113 = vrot.slane %v112, 1
  %v114 = vadd.f32 %v112, %v113
  %v115 = vadd.f32 %v83, %v85
  %v116 = vadd.f32 %v115, %v87
  %v117 = vadd.f32 %v116, %v89
  %v118 = vadd.f32 %v117, %v91
  %v119 = vadd.f32 %v118, %v93
  %v120 = vadd.f32 %v119, %v95
  %v121 = vadd.f32 %v120, %v97
  %v122 = vadd.f32 %v121, %v99
  %v123 = vrot.slane %v122, 4
  %v124 = vadd.f32 %v122, %v123
  %v125 = vrot.slane %v124, 2
  %v126 = vadd.f32 %v124, %v125
  %v127 = vrot.slane %v126, 1
  %v128 = vadd.f32 %v126, %v127
  %v131 = vcombine.low %v114, %v128
  %v133 = vunpack.c.l.s4 1966171168
  %v134 = vunpack.c.0.s8 %v133
  %v135 = vlaneseq
  %v136 = vshrl.u32 %v135, 7
  %v137 = vsub.s32 %v134, %v136
  %v138 = vrot.slane %v131, %v137
  %v140 = vunpack.c.l.s4 1966171168
  %v141 = vunpack.c.0.s8 %v140
  %v142 = vlaneseq
  %v143 = vshrl.u32 %v142, 7
  %v144 = vsub.s32 %v141, %v143
  %v145 = vrot.slane %v138, %v144
  %v147 = vadd.f32 %v100, %v145
  %v148 = vlaneseq
  %vm149 = vcmp.ge.s32.totalorder %v148, 0
  %vm150 = vcmp.lt.s32.totalorder %v148, 256
  %vm151 = vmand %vm149, %vm150
  %152 = vst.msk [vmem:[%s2] ss:$8 sm:$0x3] %vm151, %v147
  %153 = vst.msk [vmem:[%s2] ss:$8 sm:$0x0] %vm151, %v147
  %v154 = vmul.f32 %v82, %v82
  %v155 = vmul.f32 %v83, %v83
  %v156 = vmul.f32 %v84, %v84
  %v157 = vmul.f32 %v85, %v85
  %v158 = vmul.f32 %v86, %v86
  %v159 = vmul.f32 %v87, %v87
  %v160 = vmul.f32 %v88, %v88
  %v161 = vmul.f32 %v89, %v89
  %v162 = vmul.f32 %v90, %v90
  %v163 = vmul.f32 %v91, %v91
  %v164 = vmul.f32 %v92, %v92
  %v165 = vmul.f32 %v93, %v93
  %v166 = vmul.f32 %v94, %v94
  %v167 = vmul.f32 %v95, %v95
  %v168 = vmul.f32 %v96, %v96
  %v169 = vmul.f32 %v97, %v97
  %v170 = vmul.f32 %v98, %v98
  %v171 = vmul.f32 %v99, %v99
  %s172 = scalar_lea.vmem %s2, 1
  %v173 = vld [vmem:[%s172] ss:$8 sm:$0x3]
  %v174 = vadd.f32 %v154, %v156
  %v175 = vadd.f32 %v174, %v158
  %v176 = vadd.f32 %v175, %v160
  %v177 = vadd.f32 %v176, %v162
  %v178 = vadd.f32 %v177, %v164
  %v179 = vadd.f32 %v178, %v166
  %v180 = vadd.f32 %v179, %v168
  %v181 = vadd.f32 %v180, %v170
  %v182 = vrot.slane %v181, 4
  %v183 = vadd.f32 %v181, %v182
  %v184 = vrot.slane %v183, 2
  %v185 = vadd.f32 %v183, %v184
  %v186 = vrot.slane %v185, 1
  %v187 = vadd.f32 %v185, %v186
  %v188 = vadd.f32 %v155, %v157
  %v189 = vadd.f32 %v188, %v159
  %v190 = vadd.f32 %v189, %v161
  %v191 = vadd.f32 %v190, %v163
  %v192 = vadd.f32 %v191, %v165
  %v193 = vadd.f32 %v192, %v167
  %v194 = vadd.f32 %v193, %v169
  %v195 = vadd.f32 %v194, %v171
  %v196 = vrot.slane %v195, 4
  %v197 = vadd.f32 %v195, %v196
  %v198 = vrot.slane %v197, 2
  %v199 = vadd.f32 %v197, %v198
  %v200 = vrot.slane %v199, 1
  %v201 = vadd.f32 %v199, %v200
  %v204 = vcombine.low %v187, %v201
  %v206 = vunpack.c.l.s4 1966171168
  %v207 = vunpack.c.0.s8 %v206
  %v208 = vlaneseq
  %v209 = vshrl.u32 %v208, 7
  %v210 = vsub.s32 %v207, %v209
  %v211 = vrot.slane %v204, %v210
  %v213 = vunpack.c.l.s4 1966171168
  %v214 = vunpack.c.0.s8 %v213
  %v215 = vlaneseq
  %v216 = vshrl.u32 %v215, 7
  %v217 = vsub.s32 %v214, %v216
  %v218 = vrot.slane %v211, %v217
  %v220 = vadd.f32 %v173, %v218
  %221 = vst.msk [vmem:[%s172] ss:$8 sm:$0x3] %vm151, %v220
  %222 = vst.msk [vmem:[%s172] ss:$8 sm:$0x0] %vm151, %v220
  %v223 = vmul.f32 %v154, %v82
  %v224 = vmul.f32 %v155, %v83
  %v225 = vmul.f32 %v156, %v84
  %v226 = vmul.f32 %v157, %v85
  %v227 = vmul.f32 %v158, %v86
  %v228 = vmul.f32 %v159, %v87
  %v229 = vmul.f32 %v160, %v88
  %v230 = vmul.f32 %v161, %v89
  %v231 = vmul.f32 %v162, %v90
  %v232 = vmul.f32 %v163, %v91
  %v233 = vmul.f32 %v164, %v92
  %v234 = vmul.f32 %v165, %v93
  %v235 = vmul.f32 %v166, %v94
  %v236 = vmul.f32 %v167, %v95
  %v237 = vmul.f32 %v168, %v96
  %v238 = vmul.f32 %v169, %v97
  %v239 = vmul.f32 %v170, %v98
  %v240 = vmul.f32 %v171, %v99
  %s241 = scalar_lea.vmem %s2, 2
  %v242 = vld [vmem:[%s241] ss:$8 sm:$0x3]
  %v243 = vadd.f32 %v223, %v225
  %v244 = vadd.f32 %v243, %v227
  %v245 = vadd.f32 %v244, %v229
  %v246 = vadd.f32 %v245, %v231
  %v247 = vadd.f32 %v246, %v233
  %v248 = vadd.f32 %v247, %v235
  %v249 = vadd.f32 %v248, %v237
  %v250 = vadd.f32 %v249, %v239
  %v251 = vrot.slane %v250, 4
  %v252 = vadd.f32 %v250, %v251
  %v253 = vrot.slane %v252, 2
  %v254 = vadd.f32 %v252, %v253
  %v255 = vrot.slane %v254, 1
  %v256 = vadd.f32 %v254, %v255
  %v257 = vadd.f32 %v224, %v226
  %v258 = vadd.f32 %v257, %v228
  %v259 = vadd.f32 %v258, %v230
  %v260 = vadd.f32 %v259, %v232
  %v261 = vadd.f32 %v260, %v234
  %v262 = vadd.f32 %v261, %v236
  %v263 = vadd.f32 %v262, %v238
  %v264 = vadd.f32 %v263, %v240
  %v265 = vrot.slane %v264, 4
  %v266 = vadd.f32 %v264, %v265
  %v267 = vrot.slane %v266, 2
  %v268 = vadd.f32 %v266, %v267
  %v269 = vrot.slane %v268, 1
  %v270 = vadd.f32 %v268, %v269
  %v273 = vcombine.low %v256, %v270
  %v275 = vunpack.c.l.s4 1966171168
  %v276 = vunpack.c.0.s8 %v275
  %v277 = vlaneseq
  %v278 = vshrl.u32 %v277, 7
  %v279 = vsub.s32 %v276, %v278
  %v280 = vrot.slane %v273, %v279
  %v282 = vunpack.c.l.s4 1966171168
  %v283 = vunpack.c.0.s8 %v282
  %v284 = vlaneseq
  %v285 = vshrl.u32 %v284, 7
  %v286 = vsub.s32 %v283, %v285
  %v287 = vrot.slane %v280, %v286
  %v289 = vadd.f32 %v242, %v287
  %290 = vst.msk [vmem:[%s241] ss:$8 sm:$0x3] %vm151, %v289
  %291 = vst.msk [vmem:[%s241] ss:$8 sm:$0x0] %vm151, %v289
  %v292 = vmul.f32 %v223, %v82
  %v293 = vmul.f32 %v224, %v83
  %v294 = vmul.f32 %v225, %v84
  %v295 = vmul.f32 %v226, %v85
  %v296 = vmul.f32 %v227, %v86
  %v297 = vmul.f32 %v228, %v87
  %v298 = vmul.f32 %v229, %v88
  %v299 = vmul.f32 %v230, %v89
  %v300 = vmul.f32 %v231, %v90
  %v301 = vmul.f32 %v232, %v91
  %v302 = vmul.f32 %v233, %v92
  %v303 = vmul.f32 %v234, %v93
  %v304 = vmul.f32 %v235, %v94
  %v305 = vmul.f32 %v236, %v95
  %v306 = vmul.f32 %v237, %v96
  %v307 = vmul.f32 %v238, %v97
  %v308 = vmul.f32 %v239, %v98
  %v309 = vmul.f32 %v240, %v99
  %s310 = scalar_lea.vmem %s2, 3
  %v311 = vld [vmem:[%s310] ss:$8 sm:$0x3]
  %v312 = vadd.f32 %v292, %v294
  %v313 = vadd.f32 %v312, %v296
  %v314 = vadd.f32 %v313, %v298
  %v315 = vadd.f32 %v314, %v300
  %v316 = vadd.f32 %v315, %v302
  %v317 = vadd.f32 %v316, %v304
  %v318 = vadd.f32 %v317, %v306
  %v319 = vadd.f32 %v318, %v308
  %v320 = vrot.slane %v319, 4
  %v321 = vadd.f32 %v319, %v320
  %v322 = vrot.slane %v321, 2
  %v323 = vadd.f32 %v321, %v322
  %v324 = vrot.slane %v323, 1
  %v325 = vadd.f32 %v323, %v324
  %v326 = vadd.f32 %v293, %v295
  %v327 = vadd.f32 %v326, %v297
  %v328 = vadd.f32 %v327, %v299
  %v329 = vadd.f32 %v328, %v301
  %v330 = vadd.f32 %v329, %v303
  %v331 = vadd.f32 %v330, %v305
  %v332 = vadd.f32 %v331, %v307
  %v333 = vadd.f32 %v332, %v309
  %v334 = vrot.slane %v333, 4
  %v335 = vadd.f32 %v333, %v334
  %v336 = vrot.slane %v335, 2
  %v337 = vadd.f32 %v335, %v336
  %v338 = vrot.slane %v337, 1
  %v339 = vadd.f32 %v337, %v338
  %v342 = vcombine.low %v325, %v339
  %v344 = vunpack.c.l.s4 1966171168
  %v345 = vunpack.c.0.s8 %v344
  %v346 = vlaneseq
  %v347 = vshrl.u32 %v346, 7
  %v348 = vsub.s32 %v345, %v347
  %v349 = vrot.slane %v342, %v348
  %v351 = vunpack.c.l.s4 1966171168
  %v352 = vunpack.c.0.s8 %v351
  %v353 = vlaneseq
  %v354 = vshrl.u32 %v353, 7
  %v355 = vsub.s32 %v352, %v354
  %v356 = vrot.slane %v349, %v355
  %v358 = vadd.f32 %v311, %v356
  %359 = vst.msk [vmem:[%s310] ss:$8 sm:$0x3] %vm151, %v358
  %360 = vst.msk [vmem:[%s310] ss:$8 sm:$0x0] %vm151, %v358
  %v361 = vmul.f32 %v292, %v82
  %v362 = vmul.f32 %v293, %v83
  %v363 = vmul.f32 %v294, %v84
  %v364 = vmul.f32 %v295, %v85
  %v365 = vmul.f32 %v296, %v86
  %v366 = vmul.f32 %v297, %v87
  %v367 = vmul.f32 %v298, %v88
  %v368 = vmul.f32 %v299, %v89
  %v369 = vmul.f32 %v300, %v90
  %v370 = vmul.f32 %v301, %v91
  %v371 = vmul.f32 %v302, %v92
  %v372 = vmul.f32 %v303, %v93
  %v373 = vmul.f32 %v304, %v94
  %v374 = vmul.f32 %v305, %v95
  %v375 = vmul.f32 %v306, %v96
  %v376 = vmul.f32 %v307, %v97
  %v377 = vmul.f32 %v308, %v98
  %v378 = vmul.f32 %v309, %v99
  %s379 = scalar_lea.vmem %s2, 4
  %v380 = vld [vmem:[%s379] ss:$8 sm:$0x3]
  %v381 = vadd.f32 %v361, %v363
  %v382 = vadd.f32 %v381, %v365
  %v383 = vadd.f32 %v382, %v367
  %v384 = vadd.f32 %v383, %v369
  %v385 = vadd.f32 %v384, %v371
  %v386 = vadd.f32 %v385, %v373
  %v387 = vadd.f32 %v386, %v375
  %v388 = vadd.f32 %v387, %v377
  %v389 = vrot.slane %v388, 4
  %v390 = vadd.f32 %v388, %v389
  %v391 = vrot.slane %v390, 2
  %v392 = vadd.f32 %v390, %v391
  %v393 = vrot.slane %v392, 1
  %v394 = vadd.f32 %v392, %v393
  %v395 = vadd.f32 %v362, %v364
  %v396 = vadd.f32 %v395, %v366
  %v397 = vadd.f32 %v396, %v368
  %v398 = vadd.f32 %v397, %v370
  %v399 = vadd.f32 %v398, %v372
  %v400 = vadd.f32 %v399, %v374
  %v401 = vadd.f32 %v400, %v376
  %v402 = vadd.f32 %v401, %v378
  %v403 = vrot.slane %v402, 4
  %v404 = vadd.f32 %v402, %v403
  %v405 = vrot.slane %v404, 2
  %v406 = vadd.f32 %v404, %v405
  %v407 = vrot.slane %v406, 1
  %v408 = vadd.f32 %v406, %v407
  %v411 = vcombine.low %v394, %v408
  %v413 = vunpack.c.l.s4 1966171168
  %v414 = vunpack.c.0.s8 %v413
  %v415 = vlaneseq
  %v416 = vshrl.u32 %v415, 7
  %v417 = vsub.s32 %v414, %v416
  %v418 = vrot.slane %v411, %v417
  %v420 = vunpack.c.l.s4 1966171168
  %v421 = vunpack.c.0.s8 %v420
  %v422 = vlaneseq
  %v423 = vshrl.u32 %v422, 7
  %v424 = vsub.s32 %v421, %v423
  %v425 = vrot.slane %v418, %v424
  %v427 = vadd.f32 %v380, %v425
  %428 = vst.msk [vmem:[%s379] ss:$8 sm:$0x3] %vm151, %v427
  %429 = vst.msk [vmem:[%s379] ss:$8 sm:$0x0] %vm151, %v427
  // Predicated region
  $region14: #{cmd_forward.3} parent=0 // pred_check
    _
  $region15: #{cmd_forward.3} parent=0 // pred_check_branch
    %431 = sbr.rel (0) target = $region17
  $region16: #{cmd_forward.3} parent=0 // pred_region
    _
  $region17: #{cmd_forward.3} parent=0 // pred_fallthru
    _
  // Predicated region
  $region18: #{cmd_forward.3} parent=0 // pred_check
    _
  $region19: #{cmd_forward.3} parent=0 // pred_check_branch
    %433 = sbr.rel (0) target = $region21
  $region20: #{cmd_forward.3} parent=0 // pred_region
    _
  $region21: #{cmd_forward.3} parent=0 // pred_fallthru
    _

// kernel: cmd_forward.2
$region0: #{cmd_forward.2}
  #allocation0 [shape = 'u32[]', space=smem, size = 0x4, offset = 0x4, fixed_abs, tag = 'smem constant byte address 0x4 - core index']
  #allocation1 [shape = 'u32[144,128]{1,0:T(1,128)}', space=vmem, size = 0x12000, scoped, tag = 'internal scratch']
  %s0 = inlined_call_operand.vmem [shape: f32[1,256], index: 0, kind: input, shape index: {}]
  %s1 = inlined_call_operand.vmem [shape: f32[100,256], index: 1, kind: input, shape index: {}]
  %s2 = inlined_call_operand.vmem [shape: f32[8,256], index: 2, kind: output, shape index: {}]
  %s3 = sld [smem:[#allocation0]]
  $region22: #{cmd_forward.2} parent=0
    _
  %s5 = ssub.s32 1, %s3
  %s6 = scalar_select 0, %s5, %s3
  // Predicated region
  $region2: #{cmd_forward.2} parent=0 // pred_check
    _
  $region3: #{cmd_forward.2} parent=0 // pred_check_branch
    %8 = sbr.rel (0) target = $region5
  $region4: #{cmd_forward.2} parent=0 // pred_region
    _
  $region5: #{cmd_forward.2} parent=0 // pred_fallthru
    _
  // Predicated region
  $region6: #{cmd_forward.2} parent=0 // pred_check
    _
  $region7: #{cmd_forward.2} parent=0 // pred_check_branch
    %10 = sbr.rel (0) target = $region9
  $region8: #{cmd_forward.2} parent=0 // pred_region
    %s11 = sadd.s32 0, 0
    %p12 = scmp.lt.s32.totalorder %s11, 0
    %s13 = scalar_select %p12, %s11, 0
    %s14 = smul.u32 13, %s13
    %p15 = scmp.lt.s32.totalorder %s14, 12
    %s16 = scalar_select %p15, %s14, 12
    %s17 = smul.addr %s16, 2
    %s18 = smul.addr %s17, 8
    %s19 = scalar_lea.vmem %s1, %s18
    %s20 = sadd.s32 0, 0
    %p21 = scmp.lt.s32.totalorder %s20, 0
    %s22 = scalar_select %p21, %s20, 0
    %s23 = smul.u32 13, %s22
  $region9: #{cmd_forward.2} parent=0 // pred_fallthru
    _
  %s24 = sadd.s32 0, 0
  %p25 = scmp.lt.s32.totalorder %s24, 0
  %s26 = scalar_select %p25, %s24, 0
  %s27 = smul.u32 13, %s26
  %p28 = scmp.lt.s32.totalorder %s27, 12
  %s29 = scalar_select %p28, %s27, 12
  %s30 = smul.addr %s29, 2
  %s31 = smul.addr %s30, 8
  %s32 = scalar_lea.vmem %s1, %s31
  %s33 = sadd.s32 0, 0
  %p34 = scmp.lt.s32.totalorder %s33, 0
  %s35 = scalar_select %p34, %s33, 0
  %s36 = smul.u32 13, %s35
  %p37 = scmp.lt.s32.totalorder %s36, 12
  %s38 = scalar_select %p37, %s36, 12
  %s39 = smul.addr %s38, 2
  %s40 = smul.addr %s39, 8
  %s41 = scalar_lea.vmem %s1, %s40
  %s42 = sadd.s32 0, 0
  %p43 = scmp.lt.s32.totalorder %s42, 0
  %s44 = scalar_select %p43, %s42, 0
  %s45 = smul.u32 13, %s44
  %p46 = scmp.eq.s32.totalorder 0, 0
  // Predicated region
  $region10: #{cmd_forward.2} parent=0 // pred_check
    %p47 = pneg %p46
  $region11: #{cmd_forward.2} parent=0 // pred_check_branch
    %49 = sbr.rel (%p47) target = $region13
  $region12: #{cmd_forward.2} parent=0 // pred_region
    %50 = vst [vmem:[%s2] sm:$0xff] 0.0
    %51 = vst [vmem:[%s2 + $0x8] sm:$0xff] 0.0
  $region13: #{cmd_forward.2} parent=0 // pred_fallthru
    _
  %v52 = vld [vmem:[%s41] sm:$0xff]
  %v53 = vld [vmem:[%s41 + $0x8] sm:$0xff]
  %v54 = vld [vmem:[%s41 + $0x10] sm:$0xff]
  %v55 = vld [vmem:[%s41 + $0x18] sm:$0xff]
  %v56 = vld [vmem:[%s41 + $0x20] sm:$0xff]
  %v57 = vld [vmem:[%s41 + $0x28] sm:$0xff]
  %v58 = vld [vmem:[%s41 + $0x30] sm:$0xff]
  %v59 = vld [vmem:[%s41 + $0x38] sm:$0xff]
  %v60 = vld [vmem:[%s41 + $0x40] sm:$0xff]
  %v61 = vld [vmem:[%s41 + $0x48] sm:$0xff]
  %v62 = vld [vmem:[%s41 + $0x50] sm:$0xff]
  %v63 = vld [vmem:[%s41 + $0x58] sm:$0xff]
  %v64 = vld [vmem:[%s41 + $0x60] sm:$0xff]
  %v65 = vld [vmem:[%s41 + $0x68] sm:$0xff]
  %v66 = vld [vmem:[%s41 + $0x70] sm:$0xff]
  %v67 = vld [vmem:[%s41 + $0x78] sm:$0xff]
  %v68 = vld [vmem:[%s41 + $0x80] sm:$0xff]
  %v69 = vld [vmem:[%s41 + $0x88] sm:$0xff]
  %v70 = vld [vmem:[%s41 + $0x90] sm:$0xff]
  %v71 = vld [vmem:[%s41 + $0x98] sm:$0xff]
  %v72 = vld [vmem:[%s41 + $0xa0] sm:$0xff]
  %v73 = vld [vmem:[%s41 + $0xa8] sm:$0xff]
  %v74 = vld [vmem:[%s41 + $0xb0] sm:$0xff]
  %v75 = vld [vmem:[%s41 + $0xb8] sm:$0xff]
  %v76 = vld [vmem:[%s41 + $0xc0] sm:$0xf]
  %v77 = vld [vmem:[%s41 + $0xc8] sm:$0xf]
  %v78 = vld [vmem:[%s0] sm:$0x3]
  %v80 = vlaneseq
  %v81 = vshrl.u32 %v80, 7
  %v82 = vsub.s32 0, %v81
  %v83 = vrot.slane %v78, %v82
  %v84 = vlaneseq
  %v85 = vshrl.u32 %v84, 7
  %v86 = vsub.s32 1, %v85
  %v87 = vrot.slane %v78, %v86
  %v90 = vsub.f32 %v52, %v83
  %v91 = vsub.f32 %v53, %v87
  %v92 = vsub.f32 %v54, %v83
  %v93 = vsub.f32 %v55, %v87
  %v94 = vsub.f32 %v56, %v83
  %v95 = vsub.f32 %v57, %v87
  %v96 = vsub.f32 %v58, %v83
  %v97 = vsub.f32 %v59, %v87
  %v98 = vsub.f32 %v60, %v83
  %v99 = vsub.f32 %v61, %v87
  %v100 = vsub.f32 %v62, %v83
  %v101 = vsub.f32 %v63, %v87
  %v102 = vsub.f32 %v64, %v83
  %v103 = vsub.f32 %v65, %v87
  %v104 = vsub.f32 %v66, %v83
  %v105 = vsub.f32 %v67, %v87
  %v106 = vsub.f32 %v68, %v83
  %v107 = vsub.f32 %v69, %v87
  %v108 = vsub.f32 %v70, %v83
  %v109 = vsub.f32 %v71, %v87
  %v110 = vsub.f32 %v72, %v83
  %v111 = vsub.f32 %v73, %v87
  %v112 = vsub.f32 %v74, %v83
  %v113 = vsub.f32 %v75, %v87
  %v114 = vsub.f32 %v76, %v83
  %v115 = vsub.f32 %v77, %v87
  %v116 = vld [vmem:[%s2] ss:$8 sm:$0x3]
  %v117 = vadd.f32 %v90, %v92
  %v118 = vadd.f32 %v117, %v94
  %v119 = vadd.f32 %v118, %v96
  %v120 = vadd.f32 %v119, %v98
  %v121 = vadd.f32 %v120, %v100
  %v122 = vadd.f32 %v121, %v102
  %v123 = vadd.f32 %v122, %v104
  %v124 = vadd.f32 %v123, %v106
  %v125 = vadd.f32 %v124, %v108
  %v126 = vadd.f32 %v125, %v110
  %v127 = vadd.f32 %v126, %v112
  %vm128 = vcmask 1043456
  %v129 = vsel %vm128, %v114, 0.0
  %v130 = vadd.f32 %v127, %v129
  %v131 = vrot.slane %v130, 4
  %v132 = vadd.f32 %v130, %v131
  %v133 = vrot.slane %v132, 2
  %v134 = vadd.f32 %v132, %v133
  %v135 = vrot.slane %v134, 1
  %v136 = vadd.f32 %v134, %v135
  %v137 = vadd.f32 %v91, %v93
  %v138 = vadd.f32 %v137, %v95
  %v139 = vadd.f32 %v138, %v97
  %v140 = vadd.f32 %v139, %v99
  %v141 = vadd.f32 %v140, %v101
  %v142 = vadd.f32 %v141, %v103
  %v143 = vadd.f32 %v142, %v105
  %v144 = vadd.f32 %v143, %v107
  %v145 = vadd.f32 %v144, %v109
  %v146 = vadd.f32 %v145, %v111
  %v147 = vadd.f32 %v146, %v113
  %v148 = vsel %vm128, %v115, 0.0
  %v149 = vadd.f32 %v147, %v148
  %v150 = vrot.slane %v149, 4
  %v151 = vadd.f32 %v149, %v150
  %v152 = vrot.slane %v151, 2
  %v153 = vadd.f32 %v151, %v152
  %v154 = vrot.slane %v153, 1
  %v155 = vadd.f32 %v153, %v154
  %v158 = vcombine.low %v136, %v155
  %v160 = vunpack.c.l.s4 1966171168
  %v161 = vunpack.c.0.s8 %v160
  %v162 = vlaneseq
  %v163 = vshrl.u32 %v162, 7
  %v164 = vsub.s32 %v161, %v163
  %v165 = vrot.slane %v158, %v164
  %v167 = vunpack.c.l.s4 1966171168
  %v168 = vunpack.c.0.s8 %v167
  %v169 = vlaneseq
  %v170 = vshrl.u32 %v169, 7
  %v171 = vsub.s32 %v168, %v170
  %v172 = vrot.slane %v165, %v171
  %v174 = vadd.f32 %v116, %v172
  %v175 = vlaneseq
  %vm176 = vcmp.ge.s32.totalorder %v175, 0
  %vm177 = vcmp.lt.s32.totalorder %v175, 256
  %vm178 = vmand %vm176, %vm177
  %179 = vst.msk [vmem:[%s2] ss:$8 sm:$0x3] %vm178, %v174
  %180 = vst.msk [vmem:[%s2] ss:$8 sm:$0x0] %vm178, %v174
  %v181 = vmul.f32 %v90, %v90
  %v182 = vmul.f32 %v91, %v91
  %v183 = vmul.f32 %v92, %v92
  %v184 = vmul.f32 %v93, %v93
  %v185 = vmul.f32 %v94, %v94
  %v186 = vmul.f32 %v95, %v95
  %v187 = vmul.f32 %v96, %v96
  %v188 = vmul.f32 %v97, %v97
  %v189 = vmul.f32 %v98, %v98
  %v190 = vmul.f32 %v99, %v99
  %v191 = vmul.f32 %v100, %v100
  %v192 = vmul.f32 %v101, %v101
  %v193 = vmul.f32 %v102, %v102
  %v194 = vmul.f32 %v103, %v103
  %v195 = vmul.f32 %v104, %v104
  %v196 = vmul.f32 %v105, %v105
  %v197 = vmul.f32 %v106, %v106
  %v198 = vmul.f32 %v107, %v107
  %v199 = vmul.f32 %v108, %v108
  %v200 = vmul.f32 %v109, %v109
  %v201 = vmul.f32 %v110, %v110
  %v202 = vmul.f32 %v111, %v111
  %v203 = vmul.f32 %v112, %v112
  %v204 = vmul.f32 %v113, %v113
  %v205 = vmul.f32 %v114, %v114
  %v206 = vmul.f32 %v115, %v115
  %s207 = scalar_lea.vmem %s2, 1
  %v208 = vld [vmem:[%s207] ss:$8 sm:$0x3]
  %v209 = vadd.f32 %v181, %v183
  %v210 = vadd.f32 %v209, %v185
  %v211 = vadd.f32 %v210, %v187
  %v212 = vadd.f32 %v211, %v189
  %v213 = vadd.f32 %v212, %v191
  %v214 = vadd.f32 %v213, %v193
  %v215 = vadd.f32 %v214, %v195
  %v216 = vadd.f32 %v215, %v197
  %v217 = vadd.f32 %v216, %v199
  %v218 = vadd.f32 %v217, %v201
  %v219 = vadd.f32 %v218, %v203
  %v220 = vsel %vm128, %v205, 0.0
  %v221 = vadd.f32 %v219, %v220
  %v222 = vrot.slane %v221, 4
  %v223 = vadd.f32 %v221, %v222
  %v224 = vrot.slane %v223, 2
  %v225 = vadd.f32 %v223, %v224
  %v226 = vrot.slane %v225, 1
  %v227 = vadd.f32 %v225, %v226
  %v228 = vadd.f32 %v182, %v184
  %v229 = vadd.f32 %v228, %v186
  %v230 = vadd.f32 %v229, %v188
  %v231 = vadd.f32 %v230, %v190
  %v232 = vadd.f32 %v231, %v192
  %v233 = vadd.f32 %v232, %v194
  %v234 = vadd.f32 %v233, %v196
  %v235 = vadd.f32 %v234, %v198
  %v236 = vadd.f32 %v235, %v200
  %v237 = vadd.f32 %v236, %v202
  %v238 = vadd.f32 %v237, %v204
  %v239 = vsel %vm128, %v206, 0.0
  %v240 = vadd.f32 %v238, %v239
  %v241 = vrot.slane %v240, 4
  %v242 = vadd.f32 %v240, %v241
  %v243 = vrot.slane %v242, 2
  %v244 = vadd.f32 %v242, %v243
  %v245 = vrot.slane %v244, 1
  %v246 = vadd.f32 %v244, %v245
  %v249 = vcombine.low %v227, %v246
  %v251 = vunpack.c.l.s4 1966171168
  %v252 = vunpack.c.0.s8 %v251
  %v253 = vlaneseq
  %v254 = vshrl.u32 %v253, 7
  %v255 = vsub.s32 %v252, %v254
  %v256 = vrot.slane %v249, %v255
  %v258 = vunpack.c.l.s4 1966171168
  %v259 = vunpack.c.0.s8 %v258
  %v260 = vlaneseq
  %v261 = vshrl.u32 %v260, 7
  %v262 = vsub.s32 %v259, %v261
  %v263 = vrot.slane %v256, %v262
  %v265 = vadd.f32 %v208, %v263
  %266 = vst.msk [vmem:[%s207] ss:$8 sm:$0x3] %vm178, %v265
  %267 = vst.msk [vmem:[%s207] ss:$8 sm:$0x0] %vm178, %v265
  %v268 = vmul.f32 %v181, %v90
  %v269 = vmul.f32 %v182, %v91
  %v270 = vmul.f32 %v183, %v92
  %v271 = vmul.f32 %v184, %v93
  %v272 = vmul.f32 %v185, %v94
  %v273 = vmul.f32 %v186, %v95
  %v274 = vmul.f32 %v187, %v96
  %v275 = vmul.f32 %v188, %v97
  %v276 = vmul.f32 %v189, %v98
  %v277 = vmul.f32 %v190, %v99
  %v278 = vmul.f32 %v191, %v100
  %v279 = vmul.f32 %v192, %v101
  %v280 = vmul.f32 %v193, %v102
  %v281 = vmul.f32 %v194, %v103
  %v282 = vmul.f32 %v195, %v104
  %v283 = vmul.f32 %v196, %v105
  %v284 = vmul.f32 %v197, %v106
  %v285 = vmul.f32 %v198, %v107
  %v286 = vmul.f32 %v199, %v108
  %v287 = vmul.f32 %v200, %v109
  %v288 = vmul.f32 %v201, %v110
  %v289 = vmul.f32 %v202, %v111
  %v290 = vmul.f32 %v203, %v112
  %v291 = vmul.f32 %v204, %v113
  %v292 = vmul.f32 %v205, %v114
  %v293 = vmul.f32 %v206, %v115
  %s294 = scalar_lea.vmem %s2, 2
  %v295 = vld [vmem:[%s294] ss:$8 sm:$0x3]
  %v296 = vadd.f32 %v268, %v270
  %v297 = vadd.f32 %v296, %v272
  %v298 = vadd.f32 %v297, %v274
  %v299 = vadd.f32 %v298, %v276
  %v300 = vadd.f32 %v299, %v278
  %v301 = vadd.f32 %v300, %v280
  %v302 = vadd.f32 %v301, %v282
  %v303 = vadd.f32 %v302, %v284
  %v304 = vadd.f32 %v303, %v286
  %v305 = vadd.f32 %v304, %v288
  %v306 = vadd.f32 %v305, %v290
  %v307 = vsel %vm128, %v292, 0.0
  %v308 = vadd.f32 %v306, %v307
  %v309 = vrot.slane %v308, 4
  %v310 = vadd.f32 %v308, %v309
  %v311 = vrot.slane %v310, 2
  %v312 = vadd.f32 %v310, %v311
  %v313 = vrot.slane %v312, 1
  %v314 = vadd.f32 %v312, %v313
  %v315 = vadd.f32 %v269, %v271
  %v316 = vadd.f32 %v315, %v273
  %v317 = vadd.f32 %v316, %v275
  %v318 = vadd.f32 %v317, %v277
  %v319 = vadd.f32 %v318, %v279
  %v320 = vadd.f32 %v319, %v281
  %v321 = vadd.f32 %v320, %v283
  %v322 = vadd.f32 %v321, %v285
  %v323 = vadd.f32 %v322, %v287
  %v324 = vadd.f32 %v323, %v289
  %v325 = vadd.f32 %v324, %v291
  %v326 = vsel %vm128, %v293, 0.0
  %v327 = vadd.f32 %v325, %v326
  %v328 = vrot.slane %v327, 4
  %v329 = vadd.f32 %v327, %v328
  %v330 = vrot.slane %v329, 2
  %v331 = vadd.f32 %v329, %v330
  %v332 = vrot.slane %v331, 1
  %v333 = vadd.f32 %v331, %v332
  %v336 = vcombine.low %v314, %v333
  %v338 = vunpack.c.l.s4 1966171168
  %v339 = vunpack.c.0.s8 %v338
  %v340 = vlaneseq
  %v341 = vshrl.u32 %v340, 7
  %v342 = vsub.s32 %v339, %v341
  %v343 = vrot.slane %v336, %v342
  %v345 = vunpack.c.l.s4 1966171168
  %v346 = vunpack.c.0.s8 %v345
  %v347 = vlaneseq
  %v348 = vshrl.u32 %v347, 7
  %v349 = vsub.s32 %v346, %v348
  %v350 = vrot.slane %v343, %v349
  %v352 = vadd.f32 %v295, %v350
  %353 = vst.msk [vmem:[%s294] ss:$8 sm:$0x3] %vm178, %v352
  %354 = vst.msk [vmem:[%s294] ss:$8 sm:$0x0] %vm178, %v352
  %v355 = vmul.f32 %v268, %v90
  %v356 = vmul.f32 %v269, %v91
  %v357 = vmul.f32 %v270, %v92
  %v358 = vmul.f32 %v271, %v93
  %v359 = vmul.f32 %v272, %v94
  %v360 = vmul.f32 %v273, %v95
  %v361 = vmul.f32 %v274, %v96
  %v362 = vmul.f32 %v275, %v97
  %v363 = vmul.f32 %v276, %v98
  %v364 = vmul.f32 %v277, %v99
  %v365 = vmul.f32 %v278, %v100
  %v366 = vmul.f32 %v279, %v101
  %v367 = vmul.f32 %v280, %v102
  %v368 = vmul.f32 %v281, %v103
  %v369 = vmul.f32 %v282, %v104
  %v370 = vmul.f32 %v283, %v105
  %v371 = vmul.f32 %v284, %v106
  %v372 = vmul.f32 %v285, %v107
  %v373 = vmul.f32 %v286, %v108
  %v374 = vmul.f32 %v287, %v109
  %v375 = vmul.f32 %v288, %v110
  %v376 = vmul.f32 %v289, %v111
  %v377 = vmul.f32 %v290, %v112
  %v378 = vmul.f32 %v291, %v113
  %v379 = vmul.f32 %v292, %v114
  %v380 = vmul.f32 %v293, %v115
  %s381 = scalar_lea.vmem %s2, 3
  %v382 = vld [vmem:[%s381] ss:$8 sm:$0x3]
  %v383 = vadd.f32 %v355, %v357
  %v384 = vadd.f32 %v383, %v359
  %v385 = vadd.f32 %v384, %v361
  %v386 = vadd.f32 %v385, %v363
  %v387 = vadd.f32 %v386, %v365
  %v388 = vadd.f32 %v387, %v367
  %v389 = vadd.f32 %v388, %v369
  %v390 = vadd.f32 %v389, %v371
  %v391 = vadd.f32 %v390, %v373
  %v392 = vadd.f32 %v391, %v375
  %v393 = vadd.f32 %v392, %v377
  %v394 = vsel %vm128, %v379, 0.0
  %v395 = vadd.f32 %v393, %v394
  %v396 = vrot.slane %v395, 4
  %v397 = vadd.f32 %v395, %v396
  %v398 = vrot.slane %v397, 2
  %v399 = vadd.f32 %v397, %v398
  %v400 = vrot.slane %v399, 1
  %v401 = vadd.f32 %v399, %v400
  %v402 = vadd.f32 %v356, %v358
  %v403 = vadd.f32 %v402, %v360
  %v404 = vadd.f32 %v403, %v362
  %v405 = vadd.f32 %v404, %v364
  %v406 = vadd.f32 %v405, %v366
  %v407 = vadd.f32 %v406, %v368
  %v408 = vadd.f32 %v407, %v370
  %v409 = vadd.f32 %v408, %v372
  %v410 = vadd.f32 %v409, %v374
  %v411 = vadd.f32 %v410, %v376
  %v412 = vadd.f32 %v411, %v378
  %v413 = vsel %vm128, %v380, 0.0
  %v414 = vadd.f32 %v412, %v413
  %v415 = vrot.slane %v414, 4
  %v416 = vadd.f32 %v414, %v415
  %v417 = vrot.slane %v416, 2
  %v418 = vadd.f32 %v416, %v417
  %v419 = vrot.slane %v418, 1
  %v420 = vadd.f32 %v418, %v419
  %v423 = vcombine.low %v401, %v420
  %v425 = vunpack.c.l.s4 1966171168
  %v426 = vunpack.c.0.s8 %v425
  %v427 = vlaneseq
  %v428 = vshrl.u32 %v427, 7
  %v429 = vsub.s32 %v426, %v428
  %v430 = vrot.slane %v423, %v429
  %v432 = vunpack.c.l.s4 1966171168
  %v433 = vunpack.c.0.s8 %v432
  %v434 = vlaneseq
  %v435 = vshrl.u32 %v434, 7
  %v436 = vsub.s32 %v433, %v435
  %v437 = vrot.slane %v430, %v436
  %v439 = vadd.f32 %v382, %v437
  %440 = vst.msk [vmem:[%s381] ss:$8 sm:$0x3] %vm178, %v439
  %441 = vst.msk [vmem:[%s381] ss:$8 sm:$0x0] %vm178, %v439
  %v442 = vmul.f32 %v355, %v90
  %v443 = vmul.f32 %v356, %v91
  %v444 = vmul.f32 %v357, %v92
  %v445 = vmul.f32 %v358, %v93
  %v446 = vmul.f32 %v359, %v94
  %v447 = vmul.f32 %v360, %v95
  %v448 = vmul.f32 %v361, %v96
  %v449 = vmul.f32 %v362, %v97
  %v450 = vmul.f32 %v363, %v98
  %v451 = vmul.f32 %v364, %v99
  %v452 = vmul.f32 %v365, %v100
  %v453 = vmul.f32 %v366, %v101
  %v454 = vmul.f32 %v367, %v102
  %v455 = vmul.f32 %v368, %v103
  %v456 = vmul.f32 %v369, %v104
  %v457 = vmul.f32 %v370, %v105
  %v458 = vmul.f32 %v371, %v106
  %v459 = vmul.f32 %v372, %v107
  %v460 = vmul.f32 %v373, %v108
  %v461 = vmul.f32 %v374, %v109
  %v462 = vmul.f32 %v375, %v110
  %v463 = vmul.f32 %v376, %v111
  %v464 = vmul.f32 %v377, %v112
  %v465 = vmul.f32 %v378, %v113
  %v466 = vmul.f32 %v379, %v114
  %v467 = vmul.f32 %v380, %v115
  %s468 = scalar_lea.vmem %s2, 4
  %v469 = vld [vmem:[%s468] ss:$8 sm:$0x3]
  %v470 = vadd.f32 %v442, %v444
  %v471 = vadd.f32 %v470, %v446
  %v472 = vadd.f32 %v471, %v448
  %v473 = vadd.f32 %v472, %v450
  %v474 = vadd.f32 %v473, %v452
  %v475 = vadd.f32 %v474, %v454
  %v476 = vadd.f32 %v475, %v456
  %v477 = vadd.f32 %v476, %v458
  %v478 = vadd.f32 %v477, %v460
  %v479 = vadd.f32 %v478, %v462
  %v480 = vadd.f32 %v479, %v464
  %v481 = vsel %vm128, %v466, 0.0
  %v482 = vadd.f32 %v480, %v481
  %v483 = vrot.slane %v482, 4
  %v484 = vadd.f32 %v482, %v483
  %v485 = vrot.slane %v484, 2
  %v486 = vadd.f32 %v484, %v485
  %v487 = vrot.slane %v486, 1
  %v488 = vadd.f32 %v486, %v487
  %v489 = vadd.f32 %v443, %v445
  %v490 = vadd.f32 %v489, %v447
  %v491 = vadd.f32 %v490, %v449
  %v492 = vadd.f32 %v491, %v451
  %v493 = vadd.f32 %v492, %v453
  %v494 = vadd.f32 %v493, %v455
  %v495 = vadd.f32 %v494, %v457
  %v496 = vadd.f32 %v495, %v459
  %v497 = vadd.f32 %v496, %v461
  %v498 = vadd.f32 %v497, %v463
  %v499 = vadd.f32 %v498, %v465
  %v500 = vsel %vm128, %v467, 0.0
  %v501 = vadd.f32 %v499, %v500
  %v502 = vrot.slane %v501, 4
  %v503 = vadd.f32 %v501, %v502
  %v504 = vrot.slane %v503, 2
  %v505 = vadd.f32 %v503, %v504
  %v506 = vrot.slane %v505, 1
  %v507 = vadd.f32 %v505, %v506
  %v510 = vcombine.low %v488, %v507
  %v512 = vunpack.c.l.s4 1966171168
  %v513 = vunpack.c.0.s8 %v512
  %v514 = vlaneseq
  %v515 = vshrl.u32 %v514, 7
  %v516 = vsub.s32 %v513, %v515
  %v517 = vrot.slane %v510, %v516
  %v519 = vunpack.c.l.s4 1966171168
  %v520 = vunpack.c.0.s8 %v519
  %v521 = vlaneseq
  %v522 = vshrl.u32 %v521, 7
  %v523 = vsub.s32 %v520, %v522
  %v524 = vrot.slane %v517, %v523
  %v526 = vadd.f32 %v469, %v524
  %527 = vst.msk [vmem:[%s468] ss:$8 sm:$0x3] %vm178, %v526
  %528 = vst.msk [vmem:[%s468] ss:$8 sm:$0x0] %vm178, %v526
  // Predicated region
  $region14: #{cmd_forward.2} parent=0 // pred_check
    _
  $region15: #{cmd_forward.2} parent=0 // pred_check_branch
    %530 = sbr.rel (0) target = $region17
  $region16: #{cmd_forward.2} parent=0 // pred_region
    _
  $region17: #{cmd_forward.2} parent=0 // pred_fallthru
    _
  // Predicated region
  $region18: #{cmd_forward.2} parent=0 // pred_check
    _
  $region19: #{cmd_forward.2} parent=0 // pred_check_branch
    %532 = sbr.rel (0) target = $region21
  $region20: #{cmd_forward.2} parent=0 // pred_region
    _
  $region21: #{cmd_forward.2} parent=0 // pred_fallthru
    _

</llo_original>
